<compile_context>
chip_gen: v5e
topology: v5e:2x2
jax: 0.10.0
libtpu: 0.0.40
codegen_flags: <defaults>
</compile_context>

<pallas_src>
import functools

import jax
import jax.numpy as jnp
from jax import lax
from jax.experimental import pallas as pl
from jax.experimental.pallas import tpu as pltpu

PRIMITIVES = ['maxpool3x3', 'conv3x3-bn-relu', 'conv1x1-bn-relu']


# ----------------------------- helpers ------------------------------------- #

def _border_masks(H, W):
    """(1, H*W) boolean validity masks for the non-trivial 3x3 tap borders.

    Built from a lane iota (no HBM input).  Keyed by (axis, d) with d in {0, 2}:
      ('row', 0): source row h-1 in-range  <=>  flat index >= W
      ('row', 2): source row h+1 in-range  <=>  flat index <  (H-1)*W
      ('col', 0): source col w-1 in-range  <=>  (flat % W) >= 1
      ('col', 2): source col w+1 in-range  <=>  (flat % W) <= W-2
    Centre row / centre column (d == 1) are always valid and need no mask.
    """
    HW = H * W
    p = lax.broadcasted_iota(jnp.int32, (1, HW), 1)
    col = p % W
    return {
        ('row', 0): p >= W,
        ('row', 2): p < (H - 1) * W,
        ('col', 0): col >= 1,
        ('col', 2): col <= W - 2,
    }


def _tap_shift(dh, dw, W, HW):
    """Roll shift so that out[p] = in[p + (dh-1)*W + (dw-1)] (wrap is masked)."""
    off = (dh - 1) * W + (dw - 1)
    return (-off) % HW


def _pick_batch_block(B, HW):
    """Images folded into one grid step (lane axis).  Only grow the block while
    >=2 grid steps remain so the pipeline still overlaps DMA with compute."""
    bblk = 1
    while (bblk * HW < 1024) and (B % (bblk * 2) == 0) and (B // (bblk * 2) >= 2):
        bblk *= 2
    return bblk


def _pick_row_block(R):
    """Row-chunk for the (B*C, H*W) maxpool layout (multiple of 8 when chunked)."""
    if R <= 512:
        return R
    for cand in (512, 256, 128, 64, 32, 16, 8):
        if R % cand == 0:
            return cand
    return R


# ----------------------------- kernels ------------------------------------- #

def _conv3x3_bn_relu_kernel(x_ref, w_ref, shift_ref, o_ref, patches_ref,
                            *, H, W, C, Bblk):
    # x_ref:       (Bblk, C, HW)        images; channels in sublanes, spatial in lanes
    # w_ref:       (C_out, 9*C) bf16    BN-scale-folded, k-index = (dh*3+dw)*C + ci
    # shift_ref:   (C_out, 1)   f32     folded BN shift (beta - mean*scale)
    # o_ref:       (Bblk, C_out, HW)
    # patches_ref: (3*C, Bblk*HW)       reused per-dh patch slab (K = 3C)
    HW = H * W
    masks = _border_masks(H, W)
    fmask = {k: v.astype(jnp.float32) for k, v in masks.items()}
    pdtype = patches_ref.dtype

    acc = jnp.zeros((C, Bblk * HW), jnp.float32)
    for dh in range(3):
        # Fill the (3C, Bblk*HW) patch scratch for this kernel row: taps are XLU
        # rolls of the resident block, masked only where the border can wrap.
        for bb in range(Bblk):
            x = x_ref[bb].astype(jnp.float32)                       # (C, HW)
            for dw in range(3):
                shift = _tap_shift(dh, dw, W, HW)
                tap = x if shift == 0 else pltpu.roll(x, shift=shift, axis=1)
                m = None
                if dh != 1:
                    m = fmask[('row', dh)]
                if dw != 1:
                    cm = fmask[('col', dw)]
                    m = cm if m is None else m * cm
                if m is not None:
                    tap = tap * m                                   # (1, HW) broadcast
                patches_ref[dw * C:(dw + 1) * C,
                            bb * HW:(bb + 1) * HW] = tap.astype(pdtype)
        # One MXU dot per kernel row: (C_out, 3C) x (3C, Bblk*HW), bf16 operands,
        # f32 accumulation.
        acc = acc + jnp.dot(
            w_ref[:, dh * 3 * C:(dh + 1) * 3 * C],
            patches_ref[...].astype(jnp.bfloat16),
            preferred_element_type=jnp.float32)

    y = jnp.maximum(acc + shift_ref[...], 0.0)                      # BN shift + ReLU
    for bb in range(Bblk):
        o_ref[bb] = y[:, bb * HW:(bb + 1) * HW].astype(o_ref.dtype)


def _conv1x1_bn_relu_kernel(x_ref, w_ref, shift_ref, o_ref, *, Bblk):
    # x_ref: (Bblk, C, HW); w_ref: (C_out, C) bf16; shift_ref: (C_out, 1) f32
    for bb in range(Bblk):
        y = jnp.dot(w_ref[...], x_ref[bb].astype(jnp.bfloat16),
                    preferred_element_type=jnp.float32)
        o_ref[bb] = jnp.maximum(y + shift_ref[...], 0.0).astype(o_ref.dtype)


def _maxpool3x3_kernel(x_ref, o_ref, *, H, W):
    # x_ref / o_ref: (rows, HW) where each row is one (image, channel) plane.
    HW = H * W
    masks = _border_masks(H, W)
    neg_inf = jnp.float32(-jnp.inf)
    amask = {k: jnp.where(v, jnp.float32(0.0), neg_inf) for k, v in masks.items()}

    x = x_ref[...].astype(jnp.float32)
    acc = x                                                         # centre tap: always valid
    for dh in range(3):
        for dw in range(3):
            if dh == 1 and dw == 1:
                continue
            shift = _tap_shift(dh, dw, W, HW)
            tap = x if shift == 0 else pltpu.roll(x, shift=shift, axis=1)
            a = None
            if dh != 1:
                a = amask[('row', dh)]
            if dw != 1:
                ca = amask[('col', dw)]
                a = ca if a is None else a + ca
            acc = jnp.maximum(acc, tap + a)                         # additive 0/-inf mask
    o_ref[...] = acc.astype(o_ref.dtype)


# ----------------------------- wrappers ------------------------------------ #

def _conv3x3_bn_relu(x_flat, w_mat, shift, H, W, bblk):
    B, C, HW = x_flat.shape
    patch_dtype = jnp.bfloat16 if C % 16 == 0 else jnp.float32
    kernel = functools.partial(_conv3x3_bn_relu_kernel, H=H, W=W, C=C, Bblk=bblk)
    return pl.pallas_call(
        kernel,
        out_shape=jax.ShapeDtypeStruct((B, C, HW), x_flat.dtype),
        grid_spec=pltpu.PrefetchScalarGridSpec(
            num_scalar_prefetch=0,
            grid=(B // bblk,),
            in_specs=[
                pl.BlockSpec((bblk, C, HW), lambda b: (b, 0, 0)),
                pl.BlockSpec((C, 9 * C), lambda b: (0, 0)),
                pl.BlockSpec((C, 1), lambda b: (0, 0)),
            ],
            out_specs=pl.BlockSpec((bblk, C, HW), lambda b: (b, 0, 0)),
            scratch_shapes=[pltpu.VMEM((3 * C, bblk * HW), patch_dtype)],
        ),
        compiler_params=pltpu.CompilerParams(dimension_semantics=("parallel",)),
    )(x_flat, w_mat, shift)


def _conv1x1_bn_relu(x_flat, w_mat, shift, bblk):
    B, C, HW = x_flat.shape
    kernel = functools.partial(_conv1x1_bn_relu_kernel, Bblk=bblk)
    return pl.pallas_call(
        kernel,
        out_shape=jax.ShapeDtypeStruct((B, C, HW), x_flat.dtype),
        grid_spec=pltpu.PrefetchScalarGridSpec(
            num_scalar_prefetch=0,
            grid=(B // bblk,),
            in_specs=[
                pl.BlockSpec((bblk, C, HW), lambda b: (b, 0, 0)),
                pl.BlockSpec((C, C), lambda b: (0, 0)),
                pl.BlockSpec((C, 1), lambda b: (0, 0)),
            ],
            out_specs=pl.BlockSpec((bblk, C, HW), lambda b: (b, 0, 0)),
        ),
        compiler_params=pltpu.CompilerParams(dimension_semantics=("parallel",)),
    )(x_flat, w_mat, shift)


def _maxpool3x3(x_rows, H, W, rblk):
    R, HW = x_rows.shape
    kernel = functools.partial(_maxpool3x3_kernel, H=H, W=W)
    return pl.pallas_call(
        kernel,
        out_shape=jax.ShapeDtypeStruct((R, HW), x_rows.dtype),
        grid_spec=pltpu.PrefetchScalarGridSpec(
            num_scalar_prefetch=0,
            grid=(R // rblk,),
            in_specs=[pl.BlockSpec((rblk, HW), lambda r: (r, 0))],
            out_specs=pl.BlockSpec((rblk, HW), lambda r: (r, 0)),
        ),
        compiler_params=pltpu.CompilerParams(dimension_semantics=("parallel",)),
    )(x_rows)


class InferMixedOpPallas:
    """JAX/Pallas equivalent of Infer_MixedOp. Inputs/outputs are NCHW."""

    def __init__(self, C, stride, weights, key):
        idx = int(jnp.argmax(jnp.asarray(weights)))
        self.primitive = PRIMITIVES[idx]
        self.stride = stride
        self.C = C

        if self.primitive != 'maxpool3x3':
            k = 3 if self.primitive == 'conv3x3-bn-relu' else 1
            self.ksize = k
            self.pad = 1 if k == 3 else 0
            # Deterministic synthetic parameters (shapes match the PyTorch module).
            # PyTorch Conv2d weight layout: (C_out, C_in, kh, kw).
            w_oihw = 0.1 * jax.random.normal(key, (C, C, k, k), dtype=jnp.float32)
            gamma = 0.9 + 0.02 * jnp.arange(C, dtype=jnp.float32)
            beta = 0.01 * jnp.arange(C, dtype=jnp.float32)
            rmean = 0.05 * jnp.arange(C, dtype=jnp.float32)
            rvar = 1.0 + 0.03 * jnp.arange(C, dtype=jnp.float32)
            eps = 1e-5
            scale = gamma / jnp.sqrt(rvar + eps)
            shift = beta - rmean * scale
            # Fold BN scale into the conv weights: (x*w)*scale == x*(w*scale).
            w_scaled = w_oihw * scale[:, None, None, None]
            # (C_out, C_in, kh, kw) -> (C_out, kh*kw*C_in), k-index = (dh*k+dw)*C + ci.
            # Stored bf16: MXU operand dtype (f32 accumulation in-kernel).
            self.w_mat = (jnp.transpose(w_scaled, (0, 2, 3, 1))
                          .reshape(C, k * k * C).astype(jnp.bfloat16))
            self.shift = shift.reshape(C, 1)
            # Raw params kept only for the in-script reference check.
            self.w_oihw = w_oihw
            self.scale_vec = scale
            self.shift_vec = shift

    def __call__(self, x_nchw):
        B, C, H, W = x_nchw.shape
        s = self.stride

        if self.primitive == 'conv1x1-bn-relu':
            if s > 1:
                # 1x1 conv only reads strided positions -> subsample first (exact).
                x_nchw = x_nchw[:, :, ::s, ::s]
                H, W = x_nchw.shape[2], x_nchw.shape[3]
            HW = H * W
            x_flat = x_nchw.reshape(B, C, HW)                 # free reshape
            y = _conv1x1_bn_relu(x_flat, self.w_mat, self.shift,
                                 _pick_batch_block(B, HW))
            return y.reshape(B, C, H, W)

        HW = H * W
        if self.primitive == 'maxpool3x3':
            x_rows = x_nchw.reshape(B * C, HW)                # free reshape, fills sublanes
            y = _maxpool3x3(x_rows, H, W, _pick_row_block(B * C)).reshape(B, C, H, W)
        else:
            x_flat = x_nchw.reshape(B, C, HW)                 # free reshape
            y = _conv3x3_bn_relu(x_flat, self.w_mat, self.shift, H, W,
                                 _pick_batch_block(B, HW)).reshape(B, C, H, W)
        if s > 1:
            # TODO(synk): stride>1 for the 3x3 ops is handled by subsampling the
            # stride-1 result (correct, ~s^2 extra work); in-kernel strided patch
            # construction would remove it.
            y = y[:, :, ::s, ::s]
        return y


# ----------------------------- reference ----------------------------------- #

def _reference_forward(op, x):
    """Pure-XLA reference matching the PyTorch module semantics."""
    s = op.stride
    if op.primitive == 'maxpool3x3':
        return jax.lax.reduce_window(
            x, -jnp.inf, jax.lax.max,
            window_dimensions=(1, 1, 3, 3),
            window_strides=(1, 1, s, s),
            padding=((0, 0), (0, 0), (1, 1), (1, 1)))
    p = op.pad
    y = jax.lax.conv_general_dilated(
        x, op.w_oihw, window_strides=(s, s),
        padding=((p, p), (p, p)),
        dimension_numbers=('NCHW', 'OIHW', 'NCHW'))
    y = y * op.scale_vec[None, :, None, None] + op.shift_vec[None, :, None, None]
    return jnp.maximum(y, 0.0)


if __name__ == "__main__":
    key = jax.random.PRNGKey(0)
    kx, kw = jax.random.split(key)

    B, C, H, W = 2, 4, 16, 16
    stride = 1
    x = jax.random.normal(kx, (B, C, H, W), dtype=jnp.float32)

    # argmax of the architecture weights selects the primitive; exercise all three.
    configs = [
        jnp.array([0.1, 0.7, 0.2], dtype=jnp.float32),   # -> conv3x3-bn-relu (original demo)
        jnp.array([0.1, 0.2, 0.7], dtype=jnp.float32),   # -> conv1x1-bn-relu
        jnp.array([0.7, 0.1, 0.2], dtype=jnp.float32),   # -> maxpool3x3
    ]
    for arch_weights in configs:
        op = InferMixedOpPallas(C, stride, arch_weights, kw)
        out = op(x)
        jax.block_until_ready(out)
        assert out.shape == (B, C, H, W), out.shape
        ref = _reference_forward(op, x)
        # Conv paths use bf16 MXU operands (f32 accumulation) -> looser tolerance
        # vs. the f32 XLA reference; maxpool is exact.
        if op.primitive == 'maxpool3x3':
            atol = rtol = 1e-5
        else:
            atol = rtol = 3e-2
        assert jnp.allclose(out, ref, atol=atol, rtol=rtol), (
            op.primitive, float(jnp.max(jnp.abs(out - ref))))
    print("KERNEL_OK")
</pallas_src>

<mosaic_0001>
module attributes {stable_mosaic.version = 11 : i64} {
  func.func @_conv3x3_bn_relu_kernel(%arg0: i32, %arg1: memref<1x4x256xf32, #tpu.memory_space<vmem>>, %arg2: memref<4x36xbf16, #tpu.memory_space<vmem>>, %arg3: memref<4x1xf32, #tpu.memory_space<vmem>>, %arg4: memref<1x4x256xf32, #tpu.memory_space<vmem>>, %arg5: memref<12x256xf32, #tpu.memory_space<vmem>>) attributes {dimension_semantics = [#tpu.dimension_semantics<parallel>], iteration_bounds = array<i64: 2>, scalar_prefetch = 0 : i64, scratch_operands = 1 : i64, tpu.core_type = #tpu.core_type<tc>, window_params = [{transform_indices = @transform_0, window_bounds = array<i64: 1, 4, 256>}, {pipeline_mode = #tpu.pipeline_mode<synchronous>, transform_indices = @transform_1, window_bounds = array<i64: 4, 36>}, {pipeline_mode = #tpu.pipeline_mode<synchronous>, transform_indices = @transform_2, window_bounds = array<i64: 4, 1>}, {transform_indices = @transform_3, window_bounds = array<i64: 1, 4, 256>}]} {
    %0 = tpu.iota {dimensions = array<i32: 1>} : vector<1x256xi32>
    %c16_i32 = arith.constant 16 : i32
    %c0_i32 = arith.constant 0 : i32
    %1 = arith.cmpi eq, %c16_i32, %c0_i32 : i32
    %c1_i32 = arith.constant 1 : i32
    %2 = arith.select %1, %c1_i32, %c16_i32 : i32
    %3 = vector.broadcast %2 : i32 to vector<1x256xi32>
    %4 = arith.remsi %0, %3 : vector<1x256xi32>
    %c0_i32_0 = arith.constant 0 : i32
    %5 = vector.broadcast %c0_i32_0 : i32 to vector<1x256xi32>
    %6 = arith.cmpi ne, %4, %5 : vector<1x256xi32>
    %c0_i32_1 = arith.constant 0 : i32
    %7 = vector.broadcast %c0_i32_1 : i32 to vector<1x256xi32>
    %8 = arith.cmpi slt, %4, %7 : vector<1x256xi32>
    %c0_i32_2 = arith.constant 0 : i32
    %9 = arith.cmpi slt, %2, %c0_i32_2 : i32
    %10 = vector.broadcast %9 : i1 to vector<1x256xi1>
    %11 = vector.broadcast %10 : vector<1x256xi1> to vector<1x256xi1>
    %12 = arith.xori %8, %11 : vector<1x256xi1>
    %13 = arith.andi %12, %6 : vector<1x256xi1>
    %14 = vector.broadcast %2 : i32 to vector<1x256xi32>
    %15 = arith.addi %4, %14 : vector<1x256xi32>
    %16 = arith.select %13, %15, %4 : vector<1x256xi1>, vector<1x256xi32>
    %c16_i32_3 = arith.constant 16 : i32
    %17 = vector.broadcast %c16_i32_3 : i32 to vector<1x256xi32>
    %18 = arith.cmpi sge, %0, %17 : vector<1x256xi32>
    %c240_i32 = arith.constant 240 : i32
    %19 = vector.broadcast %c240_i32 : i32 to vector<1x256xi32>
    %20 = arith.cmpi slt, %0, %19 : vector<1x256xi32>
    %c1_i32_4 = arith.constant 1 : i32
    %21 = vector.broadcast %c1_i32_4 : i32 to vector<1x256xi32>
    %22 = arith.cmpi sge, %16, %21 : vector<1x256xi32>
    %c14_i32 = arith.constant 14 : i32
    %23 = vector.broadcast %c14_i32 : i32 to vector<1x256xi32>
    %24 = arith.cmpi sle, %16, %23 : vector<1x256xi32>
    %25 = arith.extui %18 : vector<1x256xi1> to vector<1x256xi32>
    %26 = arith.sitofp %25 : vector<1x256xi32> to vector<1x256xf32>
    %27 = arith.extui %20 : vector<1x256xi1> to vector<1x256xi32>
    %28 = arith.sitofp %27 : vector<1x256xi32> to vector<1x256xf32>
    %29 = arith.extui %22 : vector<1x256xi1> to vector<1x256xi32>
    %30 = arith.sitofp %29 : vector<1x256xi32> to vector<1x256xf32>
    %31 = arith.extui %24 : vector<1x256xi1> to vector<1x256xi32>
    %32 = arith.sitofp %31 : vector<1x256xi32> to vector<1x256xf32>
    %cst = arith.constant 0.000000e+00 : f32
    %33 = vector.broadcast %cst : f32 to vector<4x256xf32>
    %c0 = arith.constant 0 : index
    %c0_5 = arith.constant 0 : index
    %c0_6 = arith.constant 0 : index
    %34 = vector.load %arg1[%c0, %c0_5, %c0_6] : memref<1x4x256xf32, #tpu.memory_space<vmem>>, vector<1x4x256xf32>
    %35 = vector.shape_cast %34 : vector<1x4x256xf32> to vector<4x256xf32>
    %c17_i32 = arith.constant 17 : i32
    %36 = tpu.dynamic_rotate %35 by %c17_i32 dim 1 : vector<4x256xf32>, i32 -> vector<4x256xf32>
    %37 = arith.mulf %26, %30 : vector<1x256xf32>
    %38 = vector.broadcast %37 : vector<1x256xf32> to vector<4x256xf32>
    %39 = arith.mulf %36, %38 : vector<4x256xf32>
    %c0_7 = arith.constant 0 : index
    %c0_8 = arith.constant 0 : index
    %40 = vector.load %arg5[%c0_7, %c0_8] : memref<12x256xf32, #tpu.memory_space<vmem>>, vector<4x256xf32>
    tpu.vector_store %arg5[%c0_7, %c0_8], %39 {strides = array<i32>} : memref<12x256xf32, #tpu.memory_space<vmem>>, vector<4x256xf32>,
    %c16_i32_9 = arith.constant 16 : i32
    %41 = tpu.dynamic_rotate %35 by %c16_i32_9 dim 1 : vector<4x256xf32>, i32 -> vector<4x256xf32>
    %42 = vector.broadcast %26 : vector<1x256xf32> to vector<4x256xf32>
    %43 = arith.mulf %41, %42 : vector<4x256xf32>
    %c4 = arith.constant 4 : index
    %c0_10 = arith.constant 0 : index
    %44 = vector.load %arg5[%c4, %c0_10] : memref<12x256xf32, #tpu.memory_space<vmem>>, vector<4x256xf32>
    tpu.vector_store %arg5[%c4, %c0_10], %43 {strides = array<i32>} : memref<12x256xf32, #tpu.memory_space<vmem>>, vector<4x256xf32>,
    %c15_i32 = arith.constant 15 : i32
    %45 = tpu.dynamic_rotate %35 by %c15_i32 dim 1 : vector<4x256xf32>, i32 -> vector<4x256xf32>
    %46 = arith.mulf %26, %32 : vector<1x256xf32>
    %47 = vector.broadcast %46 : vector<1x256xf32> to vector<4x256xf32>
    %48 = arith.mulf %45, %47 : vector<4x256xf32>
    %c8 = arith.constant 8 : index
    %c0_11 = arith.constant 0 : index
    %49 = vector.load %arg5[%c8, %c0_11] : memref<12x256xf32, #tpu.memory_space<vmem>>, vector<4x256xf32>
    tpu.vector_store %arg5[%c8, %c0_11], %48 {strides = array<i32>} : memref<12x256xf32, #tpu.memory_space<vmem>>, vector<4x256xf32>,
    %c0_12 = arith.constant 0 : index
    %c0_13 = arith.constant 0 : index
    %50 = vector.load %arg2[%c0_12, %c0_13] : memref<4x36xbf16, #tpu.memory_space<vmem>>, vector<4x12xbf16>
    %c0_14 = arith.constant 0 : index
    %c0_15 = arith.constant 0 : index
    %51 = vector.load %arg5[%c0_14, %c0_15] : memref<12x256xf32, #tpu.memory_space<vmem>>, vector<12x256xf32>
    %52 = arith.truncf %51 : vector<12x256xf32> to vector<12x256xbf16>
    %cst_16 = arith.constant dense<0.000000e+00> : vector<4x256xf32>
    %53 = tpu.matmul %50, %52, %cst_16 {dimension_numbers = #tpu.dot_dimension_numbers<[1], [0], [0], [1], [0, 0, 1, 1], [], []>} : vector<4x12xbf16>, vector<12x256xbf16>, vector<4x256xf32> -> vector<4x256xf32>
    %54 = arith.addf %33, %53 : vector<4x256xf32>
    %c0_17 = arith.constant 0 : index
    %c0_18 = arith.constant 0 : index
    %c0_19 = arith.constant 0 : index
    %55 = vector.load %arg1[%c0_17, %c0_18, %c0_19] : memref<1x4x256xf32, #tpu.memory_space<vmem>>, vector<1x4x256xf32>
    %56 = vector.shape_cast %55 : vector<1x4x256xf32> to vector<4x256xf32>
    %c1_i32_20 = arith.constant 1 : i32
    %57 = tpu.dynamic_rotate %56 by %c1_i32_20 dim 1 : vector<4x256xf32>, i32 -> vector<4x256xf32>
    %58 = vector.broadcast %30 : vector<1x256xf32> to vector<4x256xf32>
    %59 = arith.mulf %57, %58 : vector<4x256xf32>
    %c0_21 = arith.constant 0 : index
    %c0_22 = arith.constant 0 : index
    %60 = vector.load %arg5[%c0_21, %c0_22] : memref<12x256xf32, #tpu.memory_space<vmem>>, vector<4x256xf32>
    tpu.vector_store %arg5[%c0_21, %c0_22], %59 {strides = array<i32>} : memref<12x256xf32, #tpu.memory_space<vmem>>, vector<4x256xf32>,
    %c4_23 = arith.constant 4 : index
    %c0_24 = arith.constant 0 : index
    %61 = vector.load %arg5[%c4_23, %c0_24] : memref<12x256xf32, #tpu.memory_space<vmem>>, vector<4x256xf32>
    tpu.vector_store %arg5[%c4_23, %c0_24], %56 {strides = array<i32>} : memref<12x256xf32, #tpu.memory_space<vmem>>, vector<4x256xf32>,
    %c255_i32 = arith.constant 255 : i32
    %62 = tpu.dynamic_rotate %56 by %c255_i32 dim 1 : vector<4x256xf32>, i32 -> vector<4x256xf32>
    %63 = vector.broadcast %32 : vector<1x256xf32> to vector<4x256xf32>
    %64 = arith.mulf %62, %63 : vector<4x256xf32>
    %c8_25 = arith.constant 8 : index
    %c0_26 = arith.constant 0 : index
    %65 = vector.load %arg5[%c8_25, %c0_26] : memref<12x256xf32, #tpu.memory_space<vmem>>, vector<4x256xf32>
    tpu.vector_store %arg5[%c8_25, %c0_26], %64 {strides = array<i32>} : memref<12x256xf32, #tpu.memory_space<vmem>>, vector<4x256xf32>,
    %c0_27 = arith.constant 0 : index
    %c12 = arith.constant 12 : index
    %66 = vector.load %arg2[%c0_27, %c12] : memref<4x36xbf16, #tpu.memory_space<vmem>>, vector<4x12xbf16>
    %c0_28 = arith.constant 0 : index
    %c0_29 = arith.constant 0 : index
    %67 = vector.load %arg5[%c0_28, %c0_29] : memref<12x256xf32, #tpu.memory_space<vmem>>, vector<12x256xf32>
    %68 = arith.truncf %67 : vector<12x256xf32> to vector<12x256xbf16>
    %cst_30 = arith.constant dense<0.000000e+00> : vector<4x256xf32>
    %69 = tpu.matmul %66, %68, %cst_30 {dimension_numbers = #tpu.dot_dimension_numbers<[1], [0], [0], [1], [0, 0, 1, 1], [], []>} : vector<4x12xbf16>, vector<12x256xbf16>, vector<4x256xf32> -> vector<4x256xf32>
    %70 = arith.addf %54, %69 : vector<4x256xf32>
    %c0_31 = arith.constant 0 : index
    %c0_32 = arith.constant 0 : index
    %c0_33 = arith.constant 0 : index
    %71 = vector.load %arg1[%c0_31, %c0_32, %c0_33] : memref<1x4x256xf32, #tpu.memory_space<vmem>>, vector<1x4x256xf32>
    %72 = vector.shape_cast %71 : vector<1x4x256xf32> to vector<4x256xf32>
    %c241_i32 = arith.constant 241 : i32
    %73 = tpu.dynamic_rotate %72 by %c241_i32 dim 1 : vector<4x256xf32>, i32 -> vector<4x256xf32>
    %74 = arith.mulf %28, %30 : vector<1x256xf32>
    %75 = vector.broadcast %74 : vector<1x256xf32> to vector<4x256xf32>
    %76 = arith.mulf %73, %75 : vector<4x256xf32>
    %c0_34 = arith.constant 0 : index
    %c0_35 = arith.constant 0 : index
    %77 = vector.load %arg5[%c0_34, %c0_35] : memref<12x256xf32, #tpu.memory_space<vmem>>, vector<4x256xf32>
    tpu.vector_store %arg5[%c0_34, %c0_35], %76 {strides = array<i32>} : memref<12x256xf32, #tpu.memory_space<vmem>>, vector<4x256xf32>,
    %c240_i32_36 = arith.constant 240 : i32
    %78 = tpu.dynamic_rotate %72 by %c240_i32_36 dim 1 : vector<4x256xf32>, i32 -> vector<4x256xf32>
    %79 = vector.broadcast %28 : vector<1x256xf32> to vector<4x256xf32>
    %80 = arith.mulf %78, %79 : vector<4x256xf32>
    %c4_37 = arith.constant 4 : index
    %c0_38 = arith.constant 0 : index
    %81 = vector.load %arg5[%c4_37, %c0_38] : memref<12x256xf32, #tpu.memory_space<vmem>>, vector<4x256xf32>
    tpu.vector_store %arg5[%c4_37, %c0_38], %80 {strides = array<i32>} : memref<12x256xf32, #tpu.memory_space<vmem>>, vector<4x256xf32>,
    %c239_i32 = arith.constant 239 : i32
    %82 = tpu.dynamic_rotate %72 by %c239_i32 dim 1 : vector<4x256xf32>, i32 -> vector<4x256xf32>
    %83 = arith.mulf %28, %32 : vector<1x256xf32>
    %84 = vector.broadcast %83 : vector<1x256xf32> to vector<4x256xf32>
    %85 = arith.mulf %82, %84 : vector<4x256xf32>
    %c8_39 = arith.constant 8 : index
    %c0_40 = arith.constant 0 : index
    %86 = vector.load %arg5[%c8_39, %c0_40] : memref<12x256xf32, #tpu.memory_space<vmem>>, vector<4x256xf32>
    tpu.vector_store %arg5[%c8_39, %c0_40], %85 {strides = array<i32>} : memref<12x256xf32, #tpu.memory_space<vmem>>, vector<4x256xf32>,
    %c0_41 = arith.constant 0 : index
    %c24 = arith.constant 24 : index
    %87 = vector.load %arg2[%c0_41, %c24] : memref<4x36xbf16, #tpu.memory_space<vmem>>, vector<4x12xbf16>
    %c0_42 = arith.constant 0 : index
    %c0_43 = arith.constant 0 : index
    %88 = vector.load %arg5[%c0_42, %c0_43] : memref<12x256xf32, #tpu.memory_space<vmem>>, vector<12x256xf32>
    %89 = arith.truncf %88 : vector<12x256xf32> to vector<12x256xbf16>
    %cst_44 = arith.constant dense<0.000000e+00> : vector<4x256xf32>
    %90 = tpu.matmul %87, %89, %cst_44 {dimension_numbers = #tpu.dot_dimension_numbers<[1], [0], [0], [1], [0, 0, 1, 1], [], []>} : vector<4x12xbf16>, vector<12x256xbf16>, vector<4x256xf32> -> vector<4x256xf32>
    %91 = arith.addf %70, %90 : vector<4x256xf32>
    %c0_45 = arith.constant 0 : index
    %c0_46 = arith.constant 0 : index
    %92 = vector.load %arg3[%c0_45, %c0_46] : memref<4x1xf32, #tpu.memory_space<vmem>>, vector<4x1xf32>
    %93 = vector.broadcast %92 : vector<4x1xf32> to vector<4x256xf32>
    %94 = arith.addf %91, %93 : vector<4x256xf32>
    %cst_47 = arith.constant 0.000000e+00 : f32
    %95 = vector.broadcast %cst_47 : f32 to vector<4x256xf32>
    %96 = arith.maximumf %94, %95 : vector<4x256xf32>
    %c0_48 = arith.constant 0 : index
    %c0_49 = arith.constant 0 : index
    %c0_50 = arith.constant 0 : index
    %97 = vector.load %arg4[%c0_48, %c0_49, %c0_50] : memref<1x4x256xf32, #tpu.memory_space<vmem>>, vector<1x4x256xf32>
    %98 = vector.shape_cast %97 : vector<1x4x256xf32> to vector<4x256xf32>
    %99 = vector.shape_cast %96 : vector<4x256xf32> to vector<1x4x256xf32>
    tpu.vector_store %arg4[%c0_48, %c0_49, %c0_50], %99 {strides = array<i32>} : memref<1x4x256xf32, #tpu.memory_space<vmem>>, vector<1x4x256xf32>,
    return
  }
  func.func @transform_0(%arg0: i32) -> (i32, i32, i32) {
    %c0_i32 = arith.constant 0 : i32
    %c0_i32_0 = arith.constant 0 : i32
    %c0_i32_1 = arith.constant 0 : i32
    return %arg0, %c0_i32, %c0_i32_0 : i32, i32, i32
  }
  func.func @transform_1(%arg0: i32) -> (i32, i32) {
    %c0_i32 = arith.constant 0 : i32
    %c0_i32_0 = arith.constant 0 : i32
    %c0_i32_1 = arith.constant 0 : i32
    return %c0_i32, %c0_i32_0 : i32, i32
  }
  func.func @transform_2(%arg0: i32) -> (i32, i32) {
    %c0_i32 = arith.constant 0 : i32
    %c0_i32_0 = arith.constant 0 : i32
    %c0_i32_1 = arith.constant 0 : i32
    return %c0_i32, %c0_i32_0 : i32, i32
  }
  func.func @transform_3(%arg0: i32) -> (i32, i32, i32) {
    %c0_i32 = arith.constant 0 : i32
    %c0_i32_0 = arith.constant 0 : i32
    %c0_i32_1 = arith.constant 0 : i32
    return %arg0, %c0_i32, %c0_i32_0 : i32, i32, i32
  }
}

</mosaic_0001>

<llo_original>
// kernel: tpu_custom_call.1
$region0: #{tpu_custom_call.1}
  #allocation0 [shape = 'u32[]', space=smem, size = 0x4, offset = 0x4, fixed_abs, tag = 'smem constant byte address 0x4 - core index']
  #allocation1 [shape = 'u32[72,128]{1,0:T(1,128)}', space=vmem, size = 0x9000, scoped, tag = 'internal scratch']
  #allocation2 [shape = 'f32[12,256]{1,0:T(8,128)}', space=vmem, size = 0x4000, scoped, tag = 'scratch operand']
  %s0 = inlined_call_operand.hbm [shape: f32[2,4,256], index: 0, kind: input, shape index: {}]
  %s1 = inlined_call_operand.vmem [shape: bf16[4,36], index: 1, kind: input, shape index: {}]
  %s2 = inlined_call_operand.vmem [shape: f32[4,1], index: 2, kind: input, shape index: {}]
  %s3 = inlined_call_operand.hbm [shape: f32[2,4,256], index: 3, kind: output, shape index: {}]
  %s4 = sld [smem:[#allocation0]]
  $region49: #{tpu_custom_call.1} parent=0
    _
  %s6 = ssub.s32 1, %s4
  %s7 = scalar_select 0, %s6, %s4
  $region1: #{tpu_custom_call.1} parent=0
    #allocation3 [shape = 'u8[8192]{0}', space=vmem, size = 0x2000, scoped, tag = 'input window, operand 0']
    #allocation4 [shape = 's32[2]{0}', space=sflag, size = 0x8, scoped, tag = 'scoped memory for tpu_custom_call.1']
    #allocation5 [shape = 's32[2]{0}', space=sflag, size = 0x8, scoped, tag = 'scoped memory for tpu_custom_call.1']
    #allocation6 [shape = 'u8[8192]{0}', space=vmem, size = 0x2000, scoped, tag = 'output window, operand 0']
    %8 = vsyncpa [#allocation4], 0
    %s9 = scalar_lea.sflag [#allocation4], 1
    %10 = vsyncpa %s9, 0
    %11 = vsyncpa [#allocation5], 0
    %s12 = scalar_lea.sflag [#allocation5], 1
    %13 = vsyncpa %s12, 0
    loop: start=0, step=1, limit=4
    $region2: #{tpu_custom_call.1} parent=1 // loop_pre_header
      _
    $region3: #{tpu_custom_call.1} parent=1 // loop_header
      %s15 = sphi 0, %s19
      %p16 = scmp.ge.s32.totalorder %s15, 4
      %s25 = sphi 0, %s27
      %s28 = sphi 0, %s25
      %s29 = sphi 0, %s28
      %s45 = sphi 0, %s29
      %s49 = sphi 0, %s49
      %s51 = sphi 0, %s49
      %s52 = sphi 0, %s51
      %s66 = sphi 0, %s52
      %s70 = sphi 0, %s70
      %s72 = sphi 0, %s70
      %s73 = sphi 0, %s72
      %s87 = sphi 0, %s73
      %s93 = sphi 0, %s95
      %s96 = sphi 0, %s93
      %s97 = sphi 0, %s96
      %s113 = sphi 0, %s97
    $region4: #{tpu_custom_call.1} parent=1 // loop_header_branch
      %18 = sbr.rel (%p16) target = $region8
    $region5: #{tpu_custom_call.1} parent=1 // loop_body
      %s20 = ssub.s32 %s15, 1
      %s21 = ssub.s32 %s15, 2
      %s22 = sadd.s32 %s15, 1
      %s23 = ssub.s32 %s15, %s22
      %p24 = scmp.eq.s32.totalorder %s23, 0
      %s26 = sadd.s32 %s25, 1
      %s27 = scalar_select %p24, %s25, %s26
      %p30 = pneg %p24
      %p31 = scmp.eq.s32.totalorder %s15, 1
      %p32 = por %p30, %p31
      %p33 = scmp.ne.s32.totalorder %s25, %s28
      %p34 = scmp.eq.s32.totalorder %s15, 0
      %p35 = por %p33, %p34
      %p36 = scmp.ne.s32.totalorder %s25, %s28
      %p37 = scmp.eq.s32.totalorder %s20, 1
      %p38 = por %p36, %p37
      %p39 = scmp.ne.s32.totalorder %s28, %s29
      %p40 = scmp.eq.s32.totalorder %s20, 0
      %p41 = por %p39, %p40
      %p42 = scmp.ne.s32.totalorder %s28, %s29
      %p43 = scmp.eq.s32.totalorder %s21, 1
      %p44 = por %p42, %p43
      %p46 = scmp.ne.s32.totalorder %s29, %s45
      %p47 = scmp.eq.s32.totalorder %s21, 0
      %p48 = por %p46, %p47
      %s50 = sadd.s32 %s49, 1
      %p53 = scmp.eq.s32.totalorder %s15, 1
      %p54 = scmp.ne.s32.totalorder %s49, %s51
      %p55 = scmp.eq.s32.totalorder %s15, 0
      %p56 = por %p54, %p55
      %p57 = scmp.ne.s32.totalorder %s49, %s51
      %p58 = scmp.eq.s32.totalorder %s20, 1
      %p59 = por %p57, %p58
      %p60 = scmp.ne.s32.totalorder %s51, %s52
      %p61 = scmp.eq.s32.totalorder %s20, 0
      %p62 = por %p60, %p61
      %p63 = scmp.ne.s32.totalorder %s51, %s52
      %p64 = scmp.eq.s32.totalorder %s21, 1
      %p65 = por %p63, %p64
      %p67 = scmp.ne.s32.totalorder %s52, %s66
      %p68 = scmp.eq.s32.totalorder %s21, 0
      %p69 = por %p67, %p68
      %s71 = sadd.s32 %s70, 1
      %p74 = scmp.eq.s32.totalorder %s15, 1
      %p75 = scmp.ne.s32.totalorder %s70, %s72
      %p76 = scmp.eq.s32.totalorder %s15, 0
      %p77 = por %p75, %p76
      %p78 = scmp.ne.s32.totalorder %s70, %s72
      %p79 = scmp.eq.s32.totalorder %s20, 1
      %p80 = por %p78, %p79
      %p81 = scmp.ne.s32.totalorder %s72, %s73
      %p82 = scmp.eq.s32.totalorder %s20, 0
      %p83 = por %p81, %p82
      %p84 = scmp.ne.s32.totalorder %s72, %s73
      %p85 = scmp.eq.s32.totalorder %s21, 1
      %p86 = por %p84, %p85
      %p88 = scmp.ne.s32.totalorder %s73, %s87
      %p89 = scmp.eq.s32.totalorder %s21, 0
      %p90 = por %p88, %p89
      %s91 = ssub.s32 %s15, %s22
      %p92 = scmp.eq.s32.totalorder %s91, 0
      %s94 = sadd.s32 %s93, 1
      %s95 = scalar_select %p92, %s93, %s94
      %p98 = pneg %p92
      %p99 = scmp.eq.s32.totalorder %s15, 1
      %p100 = por %p98, %p99
      %p101 = scmp.ne.s32.totalorder %s93, %s96
      %p102 = scmp.eq.s32.totalorder %s15, 0
      %p103 = por %p101, %p102
      %p104 = scmp.ne.s32.totalorder %s93, %s96
      %p105 = scmp.eq.s32.totalorder %s20, 1
      %p106 = por %p104, %p105
      %p107 = scmp.ne.s32.totalorder %s96, %s97
      %p108 = scmp.eq.s32.totalorder %s20, 0
      %p109 = por %p107, %p108
      %p110 = scmp.ne.s32.totalorder %s96, %s97
      %p111 = scmp.eq.s32.totalorder %s21, 1
      %p112 = por %p110, %p111
      %p114 = scmp.ne.s32.totalorder %s97, %s113
      %p115 = scmp.eq.s32.totalorder %s21, 0
      %p116 = por %p114, %p115
      %p117 = scmp.le.s32.totalorder 1, %s15
      %p118 = scmp.lt.s32.totalorder %s15, 3
      %p119 = pnand %p117, %p118
      %p120 = pneg %p119
      // Predicated region
      $region9: #{tpu_custom_call.1} parent=5 // pred_check
        _
      $region10: #{tpu_custom_call.1} parent=5 // pred_check_branch
        %122 = sbr.rel (%p119) target = $region12
      $region11: #{tpu_custom_call.1} parent=5 // pred_region
        %s123 = ssub.s32 %s15, 1
        // Predicated region
        $region13: #{tpu_custom_call.1} parent=11 // pred_check
          %p124 = pneg %p62
        $region14: #{tpu_custom_call.1} parent=11 // pred_check_branch
          %126 = sbr.rel (%p124) target = $region16
        $region15: #{tpu_custom_call.1} parent=11 // pred_region
          _
        $region16: #{tpu_custom_call.1} parent=11 // pred_fallthru
          _
        // Predicated region
        $region17: #{tpu_custom_call.1} parent=11 // pred_check
          %p127 = pneg %p83
        $region18: #{tpu_custom_call.1} parent=11 // pred_check_branch
          %129 = sbr.rel (%p127) target = $region20
        $region19: #{tpu_custom_call.1} parent=11 // pred_region
          _
        $region20: #{tpu_custom_call.1} parent=11 // pred_fallthru
          _
      $region12: #{tpu_custom_call.1} parent=5 // pred_fallthru
        _
      %p130 = scmp.lt.s32.totalorder %s15, 2
      // Predicated region
      $region21: #{tpu_custom_call.1} parent=5 // pred_check
        %p131 = pneg %p130
      $region22: #{tpu_custom_call.1} parent=5 // pred_check_branch
        %133 = sbr.rel (%p131) target = $region24
      $region23: #{tpu_custom_call.1} parent=5 // pred_region
        // Predicated region
        $region25: #{tpu_custom_call.1} parent=23 // pred_check
          %p134 = pneg %p35
        $region26: #{tpu_custom_call.1} parent=23 // pred_check_branch
          %136 = sbr.rel (%p134) target = $region28
        $region27: #{tpu_custom_call.1} parent=23 // pred_region
          %s137 = sand.u32 %s25, 1
          %s138 = scalar_lea.sflag [#allocation4], %s137
          %s139 = sand.u32 %s25, 1
          %s140 = smul.addr %s139, 8
          %s141 = scalar_lea.vmem [#allocation3], %s140
          %143 = vsyncadd %s138, 0
          %s144 = smul.addr %s15, 2
          %s145 = smul.addr %s144, 4
          %s146 = scalar_lea.hbm %s0, %s145
          %s148 = sshll.u32 %s146, 4
          %s149 = int_to_ptr.hbm [resolvable:$true] %s148
          %s150 = sshll.u32 %s141, 4
          %s151 = int_to_ptr.vmem [resolvable:$true] %s150
          %153 = dma.hbm_to_vmem [thread:$0]  %s149, 128, %s151, %s138
        $region28: #{tpu_custom_call.1} parent=23 // pred_fallthru
          _
      $region24: #{tpu_custom_call.1} parent=5 // pred_fallthru
        _
      %p154 = scmp.le.s32.totalorder 1, %s15
      %p155 = scmp.lt.s32.totalorder %s15, 3
      %p156 = pnand %p154, %p155
      %p157 = pneg %p156
      // Predicated region
      $region29: #{tpu_custom_call.1} parent=5 // pred_check
        _
      $region30: #{tpu_custom_call.1} parent=5 // pred_check_branch
        %159 = sbr.rel (%p156) target = $region32
      $region31: #{tpu_custom_call.1} parent=5 // pred_region
        %s160 = ssub.s32 %s15, 1
        %s161 = sand.u32 %s28, 1
        %s162 = scalar_lea.sflag [#allocation4], %s161
        %s163 = sand.u32 %s28, 1
        %s164 = smul.addr %s163, 8
        %s165 = scalar_lea.vmem [#allocation3], %s164
        // Predicated region
        $region33: #{tpu_custom_call.1} parent=31 // pred_check
          %p166 = pneg %p41
        $region34: #{tpu_custom_call.1} parent=31 // pred_check_branch
          %168 = sbr.rel (%p166) target = $region36
        $region35: #{tpu_custom_call.1} parent=31 // pred_region
          %170 = dma.done %s162, 128
        $region36: #{tpu_custom_call.1} parent=31 // pred_fallthru
          _
        %s171 = sand.u32 %s28, 1
        %s172 = scalar_lea.sflag [#allocation4], %s171
        %s173 = sand.u32 %s28, 1
        %s174 = smul.addr %s173, 8
        %s175 = scalar_lea.vmem [#allocation3], %s174
        %p176 = pneg %p41
        %p177 = pneg %p38
        %p178 = pneg %p62
        %p179 = pneg %p59
        %p180 = pneg %p83
        %p181 = pneg %p80
        %p182 = pneg %p109
        %p183 = pneg %p106
        %s184 = sand.u32 %s96, 1
        %s185 = scalar_lea.sflag [#allocation5], %s184
        %s186 = sand.u32 %s96, 1
        %s187 = smul.addr %s186, 8
        %s188 = scalar_lea.vmem [#allocation6], %s187
        %v190 = vlaneseq
        %v191 = vand.u32 %v190, 127
        %v192 = vadd.s32 %v191, 128
        %vm193 = vcmp.lt.s32.totalorder %v191, 0
        %v194 = vsub.s32 0, %v191
        %v195 = vsel %vm193, %v194, %v191
        %v196 = vshrl.u32 %v195, 4
        %v197 = vand.u32 %v195, 15
        %v198 = vsub.s32 0, %v197
        %v199 = vsel %vm193, %v198, %v197
        %vm200 = vcmp.lt.s32.totalorder %v192, 0
        %v201 = vsub.s32 0, %v192
        %v202 = vsel %vm200, %v201, %v192
        %v203 = vshrl.u32 %v202, 4
        %v204 = vand.u32 %v202, 15
        %v205 = vsub.s32 0, %v204
        %v206 = vsel %vm200, %v205, %v204
        %vm207 = vcmp.ne.s32.totalorder %v199, 0
        %vm208 = vcmp.ne.s32.totalorder %v206, 0
        %vm209 = vcmp.lt.s32.totalorder %v199, 0
        %vm210 = vcmp.lt.s32.totalorder %v206, 0
        %vm211 = vmand %vm209, %vm207
        %vm212 = vmand %vm210, %vm208
        %v213 = vadd.s32 %v199, 16
        %v214 = vadd.s32 %v206, 16
        %v215 = vsel %vm211, %v213, %v199
        %v216 = vsel %vm212, %v214, %v206
        %vm217 = vcmp.ge.s32.totalorder %v191, 16
        %vm218 = vcmp.ge.s32.totalorder %v192, 16
        %vm219 = vcmp.lt.s32.totalorder %v191, 240
        %vm220 = vcmp.lt.s32.totalorder %v192, 240
        %vm221 = vcmp.ge.s32.totalorder %v215, 1
        %vm222 = vcmp.ge.s32.totalorder %v216, 1
        %vm223 = vcmp.le.s32.totalorder %v215, 14
        %vm224 = vcmp.le.s32.totalorder %v216, 14
        %v225 = vsel %vm217, 1, 0
        %v226 = vsel %vm218, 1, 0
        %v227 = vcvt.s32.f32 %v225
        %v228 = vcvt.s32.f32 %v226
        %v229 = vsel %vm219, 1, 0
        %v230 = vsel %vm220, 1, 0
        %v231 = vcvt.s32.f32 %v229
        %v232 = vcvt.s32.f32 %v230
        %v233 = vsel %vm221, 1, 0
        %v234 = vsel %vm222, 1, 0
        %v235 = vcvt.s32.f32 %v233
        %v236 = vcvt.s32.f32 %v234
        %v237 = vsel %vm223, 1, 0
        %v238 = vsel %vm224, 1, 0
        %v239 = vcvt.s32.f32 %v237
        %v240 = vcvt.s32.f32 %v238
        %v241 = vld [vmem:[%s165] sm:$0xff]
        %243 = vst [vmem:[#allocation1] ss:$2 sm:$0xff] %v241
        %v244 = vld.sshfl [vmem:[#allocation1] sm:$0xff pattern:$0x75316420]
        %v245 = vld.sshfl [vmem:[#allocation1 + $0x8] sm:$0xff pattern:$0x75316420]
        %248 = vrot.lane.b32.xlu0 %v244, 17
        %v249 = vpop.permute.xlu0 %248
        %250 = vrot.lane.b32.xlu0 %v245, 17
        %v251 = vpop.permute.xlu0 %250
        %vm252 = vcmp.lt.s32.totalorder %v191, 17
        %v253 = vsel %vm252, %v249, %v251
        %v254 = vsel %vm252, %v251, %v249
        %v255 = vmul.f32 %v227, %v235
        %v256 = vmul.f32 %v228, %v236
        %v257 = vmul.f32 %v254, %v255
        %v258 = vmul.f32 %v253, %v256
        %259 = vst [vmem:[#allocation2] sm:$0xf] %v257
        %260 = vst [vmem:[#allocation2 + $0x8] sm:$0xf] %v258
        %261 = vst [vmem:[#allocation1] ss:$2 sm:$0xff] %v241
        %v262 = vld.sshfl [vmem:[#allocation1] sm:$0xff pattern:$0x75316420]
        %v263 = vld.sshfl [vmem:[#allocation1 + $0x8] sm:$0xff pattern:$0x75316420]
        %266 = vrot.lane.b32.xlu0 %v262, 16
        %v267 = vpop.permute.xlu0 %266
        %268 = vrot.lane.b32.xlu0 %v263, 16
        %v269 = vpop.permute.xlu0 %268
        %vm270 = vcmp.lt.s32.totalorder %v191, 16
        %v271 = vsel %vm270, %v267, %v269
        %v272 = vsel %vm270, %v269, %v267
        %v273 = vmul.f32 %v272, %v227
        %v274 = vmul.f32 %v271, %v228
        %v277 = vrot.slane %v273, 4
        %v278 = vrot.slane %v274, 4
        %281 = vst [vmem:[#allocation2] sm:$0xf0] %v277
        %282 = vst [vmem:[#allocation2 + $0x8] sm:$0xf0] %v278
        %283 = vst [vmem:[#allocation1] ss:$2 sm:$0xff] %v241
        %v284 = vld.sshfl [vmem:[#allocation1] sm:$0xff pattern:$0x75316420]
        %v285 = vld.sshfl [vmem:[#allocation1 + $0x8] sm:$0xff pattern:$0x75316420]
        %288 = vrot.lane.b32.xlu0 %v284, 15
        %v289 = vpop.permute.xlu0 %288
        %290 = vrot.lane.b32.xlu0 %v285, 15
        %v291 = vpop.permute.xlu0 %290
        %vm292 = vcmp.lt.s32.totalorder %v191, 15
        %v293 = vsel %vm292, %v289, %v291
        %v294 = vsel %vm292, %v291, %v289
        %v295 = vmul.f32 %v227, %v239
        %v296 = vmul.f32 %v228, %v240
        %v297 = vmul.f32 %v294, %v295
        %v298 = vmul.f32 %v293, %v296
        %299 = vst [vmem:[#allocation2 + $0x10] sm:$0xf] %v297
        %300 = vst [vmem:[#allocation2 + $0x18] sm:$0xf] %v298
        %v301 = vld [vmem:[%s1] sm:$0x3]
        %v302 = vld [vmem:[#allocation2] sm:$0xff]
        %v303 = vld [vmem:[#allocation2 + $0x8] sm:$0xff]
        %v304 = vld [vmem:[#allocation2 + $0x10] sm:$0xf]
        %v305 = vld [vmem:[#allocation2 + $0x18] sm:$0xf]
        %v306 = vpack.c.bf16 %v304, %v302
        %v307 = vpack.c.bf16 %v305, %v303
        %v308 = vld [vmem:[%s165] sm:$0xff]
        %310 = vst [vmem:[#allocation1] ss:$2 sm:$0xff] %v308
        %v311 = vld.sshfl [vmem:[#allocation1] sm:$0xff pattern:$0x75316420]
        %v312 = vld.sshfl [vmem:[#allocation1 + $0x8] sm:$0xff pattern:$0x75316420]
        %315 = vrot.lane.b32.xlu0 %v311, 1
        %v316 = vpop.permute.xlu0 %315
        %317 = vrot.lane.b32.xlu0 %v312, 1
        %v318 = vpop.permute.xlu0 %317
        %vm319 = vcmp.lt.s32.totalorder %v191, 1
        %v320 = vsel %vm319, %v316, %v318
        %v321 = vsel %vm319, %v318, %v316
        %v322 = vmul.f32 %v321, %v235
        %v323 = vmul.f32 %v320, %v236
        %324 = vst [vmem:[#allocation2] sm:$0xf] %v322
        %325 = vst [vmem:[#allocation2 + $0x8] sm:$0xf] %v323
        %s326 = scalar_lea.vmem [#allocation1], 1
        %327 = vst [vmem:[%s326] ss:$2 sm:$0xff] %v308
        %v328 = vld.sshfl [vmem:[#allocation1] sm:$0xff pattern:$0x75316420]
        %v329 = vld.sshfl [vmem:[#allocation1 + $0x8] sm:$0xff pattern:$0x75316420]
        %332 = vst [vmem:[#allocation2] sm:$0xf0] %v328
        %333 = vst [vmem:[#allocation2 + $0x8] sm:$0xf0] %v329
        %334 = vst [vmem:[#allocation1] ss:$2 sm:$0xff] %v308
        %v335 = vld.sshfl [vmem:[#allocation1] sm:$0xff pattern:$0x75316420]
        %v336 = vld.sshfl [vmem:[#allocation1 + $0x8] sm:$0xff pattern:$0x75316420]
        %339 = vrot.lane.b32.xlu0 %v335, 127
        %v340 = vpop.permute.xlu0 %339
        %341 = vrot.lane.b32.xlu0 %v336, 127
        %v342 = vpop.permute.xlu0 %341
        %vm343 = vcmp.lt.s32.totalorder %v191, 127
        %v344 = vsel %vm343, %v340, %v342
        %v345 = vsel %vm343, %v342, %v340
        %v346 = vmul.f32 %v344, %v239
        %v347 = vmul.f32 %v345, %v240
        %348 = vst [vmem:[#allocation2 + $0x10] sm:$0xf] %v346
        %349 = vst [vmem:[#allocation2 + $0x18] sm:$0xf] %v347
        %v350 = vld [vmem:[%s1] sm:$0x3]
        %v351 = vld [vmem:[#allocation2] sm:$0xff]
        %v352 = vld [vmem:[#allocation2 + $0x8] sm:$0xff]
        %v353 = vld [vmem:[#allocation2 + $0x10] sm:$0xf]
        %v354 = vld [vmem:[#allocation2 + $0x18] sm:$0xf]
        %v355 = vpack.c.bf16 %v353, %v351
        %v356 = vpack.c.bf16 %v354, %v352
        %358 = vst [vmem:[#allocation1] ss:$4 sm:$0xff] %v350
        %v359 = vld.sshfl [vmem:[#allocation1] sm:$0xff pattern:$0x73625140]
        %361 = vrot.lane.b32.xlu0 %v359, 116
        %v362 = vpop.permute.xlu0 %361
        %vm363 = vcmask 97280
        %v365 = vsel %vm363, %v362, 0
        %vm367 = vcmask 1045504
        %v369 = vsel %vm367, %v355, 0
        %v372 = vsel %vm367, %v356, 0
        %374 = vmatpush.bf16.msra.mxu0 0
        %375 = vmatpush.bf16.msra.mxu0 0
        %376 = vmatpush.bf16.msra.mxu0 0
        %377 = vmatpush.bf16.msra.mxu0 0
        %378 = vmatpush.bf16.msra.mxu0 0
        %379 = vmatpush.bf16.msra.mxu0 0
        %380 = vmatpush.bf16.msra.mxu0 0
        %381 = vmatpush.bf16.msra.mxu0 %v369
        %382 = vmatmul.bf16.gmra.mxu0 %v365
        %v383 = vpop.f32.mrf.mxu0
        %v384 = vadd.f32 0.0, %v383
        %v385 = vpop.f32.mrf.mxu0
        %386 = vdwg.mxu0
        %387 = vmatpush.bf16.msra.mxu0 0
        %388 = vmatpush.bf16.msra.mxu0 0
        %389 = vmatpush.bf16.msra.mxu0 0
        %390 = vmatpush.bf16.msra.mxu0 0
        %391 = vmatpush.bf16.msra.mxu0 0
        %392 = vmatpush.bf16.msra.mxu0 0
        %393 = vmatpush.bf16.msra.mxu0 0
        %394 = vmatpush.bf16.msra.mxu0 %v372
        %395 = vmatmul.bf16.gmra.mxu0 %v365
        %v396 = vpop.f32.mrf.mxu0
        %v397 = vadd.f32 0.0, %v396
        %v398 = vpop.f32.mrf.mxu0
        %399 = vdwg.mxu0
        %v401 = vsel %vm363, %v301, 0
        %v404 = vsel %vm367, %v306, 0
        %v407 = vsel %vm367, %v307, 0
        %409 = vmatpush.bf16.msra.mxu0 0
        %410 = vmatpush.bf16.msra.mxu0 0
        %411 = vmatpush.bf16.msra.mxu0 0
        %412 = vmatpush.bf16.msra.mxu0 0
        %413 = vmatpush.bf16.msra.mxu0 0
        %414 = vmatpush.bf16.msra.mxu0 0
        %415 = vmatpush.bf16.msra.mxu0 0
        %416 = vmatpush.bf16.msra.mxu0 %v404
        %417 = vmatmul.bf16.gmra.mxu0 %v401
        %v418 = vpop.f32.mrf.mxu0
        %v419 = vadd.f32 %v384, %v418
        %v420 = vpop.f32.mrf.mxu0
        %421 = vdwg.mxu0
        %422 = vmatpush.bf16.msra.mxu0 0
        %423 = vmatpush.bf16.msra.mxu0 0
        %424 = vmatpush.bf16.msra.mxu0 0
        %425 = vmatpush.bf16.msra.mxu0 0
        %426 = vmatpush.bf16.msra.mxu0 0
        %427 = vmatpush.bf16.msra.mxu0 0
        %428 = vmatpush.bf16.msra.mxu0 0
        %429 = vmatpush.bf16.msra.mxu0 %v407
        %430 = vmatmul.bf16.gmra.mxu0 %v401
        %v431 = vpop.f32.mrf.mxu0
        %v432 = vadd.f32 %v397, %v431
        %v433 = vpop.f32.mrf.mxu0
        %434 = vdwg.mxu0
        %v435 = vld [vmem:[%s165] sm:$0xff]
        %437 = vst [vmem:[#allocation1] ss:$2 sm:$0xff] %v435
        %v438 = vld.sshfl [vmem:[#allocation1] sm:$0xff pattern:$0x75316420]
        %v439 = vld.sshfl [vmem:[#allocation1 + $0x8] sm:$0xff pattern:$0x75316420]
        %442 = vrot.lane.b32.xlu0 %v438, 113
        %v443 = vpop.permute.xlu0 %442
        %444 = vrot.lane.b32.xlu0 %v439, 113
        %v445 = vpop.permute.xlu0 %444
        %vm446 = vcmp.lt.s32.totalorder %v191, 113
        %v447 = vsel %vm446, %v443, %v445
        %v448 = vsel %vm446, %v445, %v443
        %v449 = vmul.f32 %v231, %v235
        %v450 = vmul.f32 %v232, %v236
        %v451 = vmul.f32 %v447, %v449
        %v452 = vmul.f32 %v448, %v450
        %453 = vst [vmem:[#allocation2] sm:$0xf] %v451
        %454 = vst [vmem:[#allocation2 + $0x8] sm:$0xf] %v452
        %455 = vst [vmem:[#allocation1] ss:$2 sm:$0xff] %v435
        %v456 = vld.sshfl [vmem:[#allocation1] sm:$0xff pattern:$0x75316420]
        %v457 = vld.sshfl [vmem:[#allocation1 + $0x8] sm:$0xff pattern:$0x75316420]
        %460 = vrot.lane.b32.xlu0 %v456, 112
        %v461 = vpop.permute.xlu0 %460
        %462 = vrot.lane.b32.xlu0 %v457, 112
        %v463 = vpop.permute.xlu0 %462
        %vm464 = vcmp.lt.s32.totalorder %v191, 112
        %v465 = vsel %vm464, %v461, %v463
        %v466 = vsel %vm464, %v463, %v461
        %v467 = vmul.f32 %v465, %v231
        %v468 = vmul.f32 %v466, %v232
        %v471 = vrot.slane %v467, 4
        %v472 = vrot.slane %v468, 4
        %475 = vst [vmem:[#allocation2] sm:$0xf0] %v471
        %476 = vst [vmem:[#allocation2 + $0x8] sm:$0xf0] %v472
        %477 = vst [vmem:[#allocation1] ss:$2 sm:$0xff] %v435
        %v478 = vld.sshfl [vmem:[#allocation1] sm:$0xff pattern:$0x75316420]
        %v479 = vld.sshfl [vmem:[#allocation1 + $0x8] sm:$0xff pattern:$0x75316420]
        %482 = vrot.lane.b32.xlu0 %v478, 111
        %v483 = vpop.permute.xlu0 %482
        %484 = vrot.lane.b32.xlu0 %v479, 111
        %v485 = vpop.permute.xlu0 %484
        %vm486 = vcmp.lt.s32.totalorder %v191, 111
        %v487 = vsel %vm486, %v483, %v485
        %v488 = vsel %vm486, %v485, %v483
        %v489 = vmul.f32 %v231, %v239
        %v490 = vmul.f32 %v232, %v240
        %v491 = vmul.f32 %v487, %v489
        %v492 = vmul.f32 %v488, %v490
        %493 = vst [vmem:[#allocation2 + $0x10] sm:$0xf] %v491
        %494 = vst [vmem:[#allocation2 + $0x18] sm:$0xf] %v492
        %v495 = vld [vmem:[%s1] sm:$0x3]
        %v496 = vld [vmem:[#allocation2] sm:$0xff]
        %v497 = vld [vmem:[#allocation2 + $0x8] sm:$0xff]
        %v498 = vld [vmem:[#allocation2 + $0x10] sm:$0xf]
        %v499 = vld [vmem:[#allocation2 + $0x18] sm:$0xf]
        %v500 = vpack.c.bf16 %v498, %v496
        %v501 = vpack.c.bf16 %v499, %v497
        %503 = vst [vmem:[#allocation1] ss:$4 sm:$0xff] %v495
        %v504 = vld.sshfl [vmem:[#allocation1] sm:$0xff pattern:$0x73625140]
        %506 = vrot.lane.b32.xlu0 %v504, 104
        %v507 = vpop.permute.xlu0 %506
        %v509 = vsel %vm363, %v507, 0
        %v512 = vsel %vm367, %v500, 0
        %v515 = vsel %vm367, %v501, 0
        %517 = vmatpush.bf16.msra.mxu0 0
        %518 = vmatpush.bf16.msra.mxu0 0
        %519 = vmatpush.bf16.msra.mxu0 0
        %520 = vmatpush.bf16.msra.mxu0 0
        %521 = vmatpush.bf16.msra.mxu0 0
        %522 = vmatpush.bf16.msra.mxu0 0
        %523 = vmatpush.bf16.msra.mxu0 0
        %524 = vmatpush.bf16.msra.mxu0 %v512
        %525 = vmatmul.bf16.gmra.mxu0 %v509
        %v526 = vpop.f32.mrf.mxu0
        %v527 = vadd.f32 0.0, %v526
        %v528 = vpop.f32.mrf.mxu0
        %529 = vdwg.mxu0
        %530 = vmatpush.bf16.msra.mxu0 0
        %531 = vmatpush.bf16.msra.mxu0 0
        %532 = vmatpush.bf16.msra.mxu0 0
        %533 = vmatpush.bf16.msra.mxu0 0
        %534 = vmatpush.bf16.msra.mxu0 0
        %535 = vmatpush.bf16.msra.mxu0 0
        %536 = vmatpush.bf16.msra.mxu0 0
        %537 = vmatpush.bf16.msra.mxu0 %v515
        %538 = vmatmul.bf16.gmra.mxu0 %v509
        %v539 = vpop.f32.mrf.mxu0
        %v540 = vadd.f32 0.0, %v539
        %v541 = vpop.f32.mrf.mxu0
        %542 = vdwg.mxu0
        %v543 = vadd.f32 %v419, %v527
        %v544 = vadd.f32 %v432, %v540
        %v545 = vld [vmem:[%s2] sm:$0xf]
        %547 = vset.pattern.permute.xlu0 0
        %548 = vperm.xlu0 %547, %v545
        %v549 = vpop.permute.xlu0 %548
        %v551 = vadd.f32 %v543, %v549
        %v552 = vadd.f32 %v544, %v549
        %v553 = vmax.f32 %v551, 0.0
        %v554 = vmax.f32 %v552, 0.0
        %v557 = vrot.slane %v554, 4
        %vm558 = vcmask 1043456
        %v559 = vsel %vm558, %v553, %v557
        %561 = vst [vmem:[%s188] sm:$0xff] %v559
        %s562 = sand.u32 %s96, 1
        %s563 = scalar_lea.sflag [#allocation5], %s562
        %s564 = sand.u32 %s96, 1
        %s565 = smul.addr %s564, 8
        %s566 = scalar_lea.vmem [#allocation6], %s565
        // Predicated region
        $region37: #{tpu_custom_call.1} parent=31 // pred_check
          %p567 = pneg %p106
        $region38: #{tpu_custom_call.1} parent=31 // pred_check_branch
          %569 = sbr.rel (%p567) target = $region40
        $region39: #{tpu_custom_call.1} parent=31 // pred_region
          %571 = vsyncadd %s563, 0
          %s572 = smul.addr %s20, 2
          %s573 = smul.addr %s572, 4
          %s574 = scalar_lea.hbm %s3, %s573
          %s576 = sshll.u32 %s566, 4
          %s577 = int_to_ptr.vmem [resolvable:$true] %s576
          %s578 = sshll.u32 %s574, 4
          %s579 = int_to_ptr.hbm [resolvable:$true] %s578
          %581 = dma.vmem_to_hbm [thread:$0]  %s577, 128, %s579, %s563
        $region40: #{tpu_custom_call.1} parent=31 // pred_fallthru
          _
      $region32: #{tpu_custom_call.1} parent=5 // pred_fallthru
        _
      %p582 = scmp.le.s32.totalorder 2, %s15
      // Predicated region
      $region41: #{tpu_custom_call.1} parent=5 // pred_check
        %p583 = pneg %p582
      $region42: #{tpu_custom_call.1} parent=5 // pred_check_branch
        %585 = sbr.rel (%p583) target = $region44
      $region43: #{tpu_custom_call.1} parent=5 // pred_region
        %s586 = ssub.s32 %s15, 2
        // Predicated region
        $region45: #{tpu_custom_call.1} parent=43 // pred_check
          %p587 = pneg %p112
        $region46: #{tpu_custom_call.1} parent=43 // pred_check_branch
          %589 = sbr.rel (%p587) target = $region48
        $region47: #{tpu_custom_call.1} parent=43 // pred_region
          %s590 = sand.u32 %s97, 1
          %s591 = scalar_lea.sflag [#allocation5], %s590
          %s592 = sand.u32 %s97, 1
          %s593 = smul.addr %s592, 8
          %s594 = scalar_lea.vmem [#allocation6], %s593
          %596 = dma.done %s591, 128
        $region48: #{tpu_custom_call.1} parent=43 // pred_fallthru
          _
      $region44: #{tpu_custom_call.1} parent=5 // pred_fallthru
        _
    $region6: #{tpu_custom_call.1} parent=1 // loop_footer
      %s19 = sadd.s32 1, %s15
    $region7: #{tpu_custom_call.1} parent=1 // loop_footer_branch
      %14 = sbr.rel target = $region3
    $region8: #{tpu_custom_call.1} parent=1 // loop_exit
      _
    %597 = vsyncpa [#allocation4], 1
    %s598 = scalar_lea.sflag [#allocation4], 1
    %599 = vsyncpa %s598, 1
    %600 = vsyncpa [#allocation5], 1
    %s601 = scalar_lea.sflag [#allocation5], 1
    %602 = vsyncpa %s601, 1

</llo_original>
